<compile_context>
chip_gen: v5e
topology: v5e:2x2
jax: 0.10.0
libtpu: 0.0.40
codegen_flags: <defaults>
</compile_context>

<pallas_src>
import functools

import jax
import jax.numpy as jnp
from jax import lax
from jax.experimental import pallas as pl
from jax.experimental.pallas import tpu as pltpu


def _round_up(n, m):
    return ((n + m - 1) // m) * m


# ----------------------------------------------------------------------------
# Pallas kernel
# ----------------------------------------------------------------------------
def _pam_kernel(x_ref, wqkv_ref, bqkv_ref, gamma_ref, o_ref, *, cqp):
    # x_ref:    (1, C, HW)          f32 activation block
    # wqkv_ref: (2*Cqp + C, C)      bf16 stacked Q/K/V 1x1-conv weights
    # bqkv_ref: (2*Cqp + C, HW)     f32 stacked biases, pre-broadcast over HW
    # gamma_ref:(1, 1)              f32 scalar in SMEM
    x = x_ref[0]                                                # (C, HW) f32

    # Single fused Q/K/V projection: one bf16 MXU matmul, f32 accumulation.
    qkv = jnp.dot(wqkv_ref[...], x.astype(jnp.bfloat16),
                  preferred_element_type=jnp.float32)
    qkv = qkv + bqkv_ref[...]                                   # (2Cqp+C, HW)

    # Sublane-aligned row slices (padded q/k rows are exactly zero).
    q = qkv[0:cqp].astype(jnp.bfloat16)                         # (Cqp, HW)
    k = qkv[cqp:2 * cqp].astype(jnp.bfloat16)                   # (Cqp, HW)
    v = qkv[2 * cqp:].astype(jnp.bfloat16)                      # (C,   HW)

    # energy_t[j, i] = sum_c k[c, j] * q[c, i]   -> (HW_key, HW_query)
    # (only the small k operand gets transposed internally)
    energy_t = lax.dot_general(k, q, (((0,), (0,)), ((), ())),
                               preferred_element_type=jnp.float32)

    # Softmax over the key axis (axis 0) with deferred normalization.
    m = jnp.max(energy_t, axis=0, keepdims=True)                # (1, HW_q)
    p = jnp.exp(energy_t - m)                                   # (HW_k, HW_q)
    denom = jnp.sum(p, axis=0, keepdims=True)                   # (1, HW_q)

    # out_un[c, i] = sum_j v[c, j] * p[j, i]     -> (C, HW_q), no transposes.
    out_un = lax.dot_general(v, p.astype(jnp.bfloat16),
                             (((1,), (0,)), ((), ())),
                             preferred_element_type=jnp.float32)

    # Deferred normalization: scale query columns by 1/denom (EUP reciprocal).
    out = out_un * pl.reciprocal(denom, approx=True)            # (C, HW)

    gamma = gamma_ref[0, 0]
    o_ref[0] = gamma * out + x


# ----------------------------------------------------------------------------
# One-time parameter packing (call at init time, NOT per forward)
# ----------------------------------------------------------------------------
def pack_pam_params(wq, bq, wk, bk, wv, bv, hw):
    """Stack Q/K/V 1x1-conv params into one bf16 projection matrix + f32 bias.

    Query/key rows are zero-padded to a multiple of 8 so the in-kernel row
    slices are sublane-aligned; the bias is pre-broadcast over the spatial dim
    so the kernel does a plain same-shape add (no width-1 lane block).
    """
    c = wv.shape[0]
    cq = wq.shape[0]
    cqp = _round_up(cq, 8)

    def pad_w(w, rows):
        w = w.astype(jnp.float32)
        return jnp.pad(w, ((0, rows - w.shape[0]), (0, 0)))

    def pad_b(b, rows):
        b = b.astype(jnp.float32)
        return jnp.pad(b, ((0, rows - b.shape[0]),))

    wqkv = jnp.concatenate(
        [pad_w(wq, cqp), pad_w(wk, cqp), wv.astype(jnp.float32)], axis=0)
    bqkv = jnp.concatenate(
        [pad_b(bq, cqp), pad_b(bk, cqp), bv.astype(jnp.float32)], axis=0)

    wqkv = wqkv.astype(jnp.bfloat16)                       # (2*cqp + c, c)
    bqkv = jnp.asarray(jnp.broadcast_to(bqkv[:, None],     # (2*cqp + c, hw)
                                        (wqkv.shape[0], hw)), dtype=jnp.float32)
    return wqkv, bqkv


# ----------------------------------------------------------------------------
# Forward wrapper (jit-able; weights already packed)
# ----------------------------------------------------------------------------
def pam_module_forward(x, wqkv, bqkv, gamma):
    """PAM_Module forward.

    x:     (B, C, H, W, 1) float32
    wqkv:  (2*Cqp + C, C)  bfloat16  (from pack_pam_params)
    bqkv:  (2*Cqp + C, HW) float32   (from pack_pam_params)
    gamma: scalar
    returns (B, C, H, W, 1) = gamma * attention(x) + x
    """
    B, C, H, W, _ = x.shape
    HW = H * W
    rows = wqkv.shape[0]
    cqp = (rows - C) // 2

    xf = x.reshape(B, C, HW)        # free reshape: merges contiguous trailing dims

    kernel = functools.partial(_pam_kernel, cqp=cqp)
    out = pl.pallas_call(
        kernel,
        grid=(B,),
        in_specs=[
            pl.BlockSpec((1, C, HW), lambda b: (b, 0, 0)),      # x (full-dim block)
            pl.BlockSpec((rows, C), lambda b: (0, 0)),          # wqkv (resident)
            pl.BlockSpec((rows, HW), lambda b: (0, 0)),         # bqkv (resident)
            pl.BlockSpec(memory_space=pltpu.MemorySpace.SMEM),  # gamma
        ],
        out_specs=pl.BlockSpec((1, C, HW), lambda b: (b, 0, 0)),
        out_shape=jax.ShapeDtypeStruct((B, C, HW), jnp.float32),
        input_output_aliases={0: 0},                            # reuse x's buffer
        compiler_params=pltpu.CompilerParams(
            dimension_semantics=("parallel",)),
    )(xf, wqkv, bqkv, jnp.reshape(gamma, (1, 1)).astype(jnp.float32))

    return out.reshape(B, C, H, W, 1)   # free reshape


# ----------------------------------------------------------------------------
# Pure-JAX reference (mirrors the PyTorch forward exactly, f32 throughout)
# ----------------------------------------------------------------------------
def pam_reference(x, wq, bq, wk, bk, wv, bv, gamma):
    B, C, H, W, _ = x.shape
    HW = H * W
    xf = x.reshape(B, C, HW)
    q = jnp.einsum('oc,bcn->bon', wq, xf) + bq[None, :, None]
    k = jnp.einsum('oc,bcn->bon', wk, xf) + bk[None, :, None]
    v = jnp.einsum('oc,bcn->bon', wv, xf) + bv[None, :, None]
    energy = jnp.einsum('bci,bcj->bij', q, k)
    attn = jax.nn.softmax(energy, axis=-1)
    out = jnp.einsum('bcj,bij->bci', v, attn)
    return (gamma * out + xf).reshape(B, C, H, W, 1)


if __name__ == "__main__":
    # Shapes consistent with the module's use in the DBDA network:
    # in_dim = 60 (so query/key channels = 60 // 8 = 7), 7x7 spatial patch.
    B, C, H, W = 2, 60, 7, 7
    Cq = C // 8

    key = jax.random.PRNGKey(0)
    ks = jax.random.split(key, 7)
    x = jax.random.normal(ks[0], (B, C, H, W, 1), dtype=jnp.float32)
    wq = 0.1 * jax.random.normal(ks[1], (Cq, C), dtype=jnp.float32)
    bq = 0.1 * jax.random.normal(ks[2], (Cq,), dtype=jnp.float32)
    wk = 0.1 * jax.random.normal(ks[3], (Cq, C), dtype=jnp.float32)
    bk = 0.1 * jax.random.normal(ks[4], (Cq,), dtype=jnp.float32)
    wv = 0.1 * jax.random.normal(ks[5], (C, C), dtype=jnp.float32)
    bv = 0.1 * jax.random.normal(ks[6], (C,), dtype=jnp.float32)
    # torch initializes gamma = 0 (attention path contributes nothing);
    # use a nonzero value here so the kernel's attention path is exercised.
    gamma = jnp.float32(0.5)

    # One-time parameter packing (init-time, outside the jitted forward).
    wqkv, bqkv = pack_pam_params(wq, bq, wk, bk, wv, bv, H * W)

    # Reference computed BEFORE the kernel call since x is donated to the kernel.
    ref = pam_reference(x, wq, bq, wk, bk, wv, bv, gamma)

    fwd = jax.jit(pam_module_forward, donate_argnums=(0,))
    out = jax.block_until_ready(fwd(x, wqkv, bqkv, gamma))

    assert out.shape == (B, C, H, W, 1), out.shape
    assert bool(jnp.all(jnp.isfinite(out)))
    # Relaxed tolerance: bf16 MXU operands + EUP approximate reciprocal
    # (real bugs produce O(1) errors; observed error is O(1e-2)).
    assert bool(jnp.allclose(out, ref, rtol=5e-2, atol=5e-2)), (
        float(jnp.max(jnp.abs(out - ref))))

    print("KERNEL_OK")
</pallas_src>

<mosaic_0001>
module attributes {stable_mosaic.version = 11 : i64} {
  func.func @_pam_kernel(%arg0: i32, %arg1: memref<1x60x49xf32, #tpu.memory_space<vmem>>, %arg2: memref<76x60xbf16, #tpu.memory_space<vmem>>, %arg3: memref<76x49xf32, #tpu.memory_space<vmem>>, %arg4: memref<1x1xf32, #tpu.memory_space<smem>>, %arg5: memref<1x60x49xf32, #tpu.memory_space<vmem>>) attributes {dimension_semantics = [#tpu.dimension_semantics<parallel>], iteration_bounds = array<i64: 2>, scalar_prefetch = 0 : i64, scratch_operands = 0 : i64, tpu.core_type = #tpu.core_type<tc>, window_params = [{transform_indices = @transform_0, window_bounds = array<i64: 1, 60, 49>}, {pipeline_mode = #tpu.pipeline_mode<synchronous>, transform_indices = @transform_1, window_bounds = array<i64: 76, 60>}, {pipeline_mode = #tpu.pipeline_mode<synchronous>, transform_indices = @transform_2, window_bounds = array<i64: 76, 49>}, {transform_indices = @transform_3, window_bounds = array<i64: 1, 1>}, {transform_indices = @transform_4, window_bounds = array<i64: 1, 60, 49>}]} {
    %c0 = arith.constant 0 : index
    %c0_0 = arith.constant 0 : index
    %c0_1 = arith.constant 0 : index
    %0 = vector.load %arg1[%c0, %c0_0, %c0_1] : memref<1x60x49xf32, #tpu.memory_space<vmem>>, vector<1x60x49xf32>
    %1 = vector.shape_cast %0 : vector<1x60x49xf32> to vector<60x49xf32>
    %c0_2 = arith.constant 0 : index
    %c0_3 = arith.constant 0 : index
    %2 = vector.load %arg2[%c0_2, %c0_3] : memref<76x60xbf16, #tpu.memory_space<vmem>>, vector<76x60xbf16>
    %3 = arith.truncf %1 : vector<60x49xf32> to vector<60x49xbf16>
    %cst = arith.constant dense<0.000000e+00> : vector<76x49xf32>
    %4 = tpu.matmul %2, %3, %cst {dimension_numbers = #tpu.dot_dimension_numbers<[1], [0], [0], [1], [0, 0, 1, 1], [], []>} : vector<76x60xbf16>, vector<60x49xbf16>, vector<76x49xf32> -> vector<76x49xf32>
    %c0_4 = arith.constant 0 : index
    %c0_5 = arith.constant 0 : index
    %5 = vector.load %arg3[%c0_4, %c0_5] : memref<76x49xf32, #tpu.memory_space<vmem>>, vector<76x49xf32>
    %6 = arith.addf %4, %5 : vector<76x49xf32>
    %7 = vector.extract_strided_slice %6 {offsets = [0, 0], sizes = [8, 49], strides = [1, 1]} : vector<76x49xf32> to vector<8x49xf32>
    %8 = arith.truncf %7 : vector<8x49xf32> to vector<8x49xbf16>
    %9 = vector.extract_strided_slice %6 {offsets = [8, 0], sizes = [8, 49], strides = [1, 1]} : vector<76x49xf32> to vector<8x49xf32>
    %10 = arith.truncf %9 : vector<8x49xf32> to vector<8x49xbf16>
    %11 = vector.extract_strided_slice %6 {offsets = [16, 0], sizes = [60, 49], strides = [1, 1]} : vector<76x49xf32> to vector<60x49xf32>
    %12 = arith.truncf %11 : vector<60x49xf32> to vector<60x49xbf16>
    %cst_6 = arith.constant dense<0.000000e+00> : vector<49x49xf32>
    %13 = tpu.matmul %10, %8, %cst_6 {dimension_numbers = #tpu.dot_dimension_numbers<[0], [0], [1], [1], [0, 1, 1, 1], [], []>} : vector<8x49xbf16>, vector<8x49xbf16>, vector<49x49xf32> -> vector<49x49xf32>
    %cst_7 = arith.constant dense<0xFF800000> : vector<49xf32>
    %14 = vector.multi_reduction <maximumf>, %13, %cst_7 [0] : vector<49x49xf32> to vector<49xf32>
    %15 = vector.shape_cast %14 : vector<49xf32> to vector<1x49xf32>
    %16 = vector.broadcast %15 : vector<1x49xf32> to vector<49x49xf32>
    %17 = arith.subf %13, %16 : vector<49x49xf32>
    %18 = math.exp %17 : vector<49x49xf32>
    %cst_8 = arith.constant dense<0.000000e+00> : vector<49xf32>
    %19 = vector.multi_reduction <add>, %18, %cst_8 [0] : vector<49x49xf32> to vector<49xf32>
    %20 = vector.shape_cast %19 : vector<49xf32> to vector<1x49xf32>
    %21 = arith.truncf %18 : vector<49x49xf32> to vector<49x49xbf16>
    %cst_9 = arith.constant dense<0.000000e+00> : vector<60x49xf32>
    %22 = tpu.matmul %12, %21, %cst_9 {dimension_numbers = #tpu.dot_dimension_numbers<[1], [0], [0], [1], [0, 0, 1, 1], [], []>} : vector<60x49xbf16>, vector<49x49xbf16>, vector<60x49xf32> -> vector<60x49xf32>
    %23 = tpu.reciprocal %20 {approx = true} : vector<1x49xf32> -> vector<1x49xf32>
    %24 = vector.broadcast %23 : vector<1x49xf32> to vector<60x49xf32>
    %25 = arith.mulf %22, %24 : vector<60x49xf32>
    %c0_10 = arith.constant 0 : index
    %c0_11 = arith.constant 0 : index
    %26 = memref.load %arg4[%c0_10, %c0_11] : memref<1x1xf32, #tpu.memory_space<smem>>
    %27 = vector.broadcast %26 : f32 to vector<60x49xf32>
    %28 = arith.mulf %27, %25 : vector<60x49xf32>
    %29 = arith.addf %28, %1 : vector<60x49xf32>
    %c0_12 = arith.constant 0 : index
    %c0_13 = arith.constant 0 : index
    %c0_14 = arith.constant 0 : index
    %30 = vector.load %arg5[%c0_12, %c0_13, %c0_14] : memref<1x60x49xf32, #tpu.memory_space<vmem>>, vector<1x60x49xf32>
    %31 = vector.shape_cast %30 : vector<1x60x49xf32> to vector<60x49xf32>
    %32 = vector.shape_cast %29 : vector<60x49xf32> to vector<1x60x49xf32>
    tpu.vector_store %arg5[%c0_12, %c0_13, %c0_14], %32 {strides = array<i32>} : memref<1x60x49xf32, #tpu.memory_space<vmem>>, vector<1x60x49xf32>,
    return
  }
  func.func @transform_0(%arg0: i32) -> (i32, i32, i32) {
    %c0_i32 = arith.constant 0 : i32
    %c0_i32_0 = arith.constant 0 : i32
    %c0_i32_1 = arith.constant 0 : i32
    return %arg0, %c0_i32, %c0_i32_0 : i32, i32, i32
  }
  func.func @transform_1(%arg0: i32) -> (i32, i32) {
    %c0_i32 = arith.constant 0 : i32
    %c0_i32_0 = arith.constant 0 : i32
    %c0_i32_1 = arith.constant 0 : i32
    return %c0_i32, %c0_i32_0 : i32, i32
  }
  func.func @transform_2(%arg0: i32) -> (i32, i32) {
    %c0_i32 = arith.constant 0 : i32
    %c0_i32_0 = arith.constant 0 : i32
    %c0_i32_1 = arith.constant 0 : i32
    return %c0_i32, %c0_i32_0 : i32, i32
  }
  func.func @transform_3(%arg0: i32) -> (i32, i32) {
    %c0_i32 = arith.constant 0 : i32
    %c0_i32_0 = arith.constant 0 : i32
    %c0_i32_1 = arith.constant 0 : i32
    return %c0_i32, %c0_i32_0 : i32, i32
  }
  func.func @transform_4(%arg0: i32) -> (i32, i32, i32) {
    %c0_i32 = arith.constant 0 : i32
    %c0_i32_0 = arith.constant 0 : i32
    %c0_i32_1 = arith.constant 0 : i32
    return %arg0, %c0_i32, %c0_i32_0 : i32, i32, i32
  }
}

</mosaic_0001>

<llo_original>
// kernel: pam_module_forward.1
$region0: #{pam_module_forward.1}
  #allocation0 [shape = 'u32[]', space=smem, size = 0x4, offset = 0x4, fixed_abs, tag = 'smem constant byte address 0x4 - core index']
  #allocation1 [shape = 'u32[72,128]{1,0:T(1,128)}', space=vmem, size = 0x9000, scoped, tag = 'internal scratch']
  #allocation2 [shape = 'f32[1,1]{1,0:T(1,128)S(6)}', space=smem, size = 0x200, scoped, tag = 'scoped memory for pam_module_forward.1']
  %s0 = inlined_call_operand.vmem [shape: f32[2,60,49], index: 0, kind: input, shape index: {}, may-alias: {0,4}]
  %s1 = inlined_call_operand.vmem [shape: bf16[76,60], index: 1, kind: input, shape index: {}]
  %s2 = inlined_call_operand.vmem [shape: f32[76,49], index: 2, kind: input, shape index: {}]
  %s3 = inlined_call_operand.<no memory space> [shape: f32[1,1], index: 3, kind: input, shape index: {}]
  %s4 = inlined_call_operand.vmem [shape: f32[2,60,49], index: 4, kind: output, shape index: {}, may-alias: {0,4}]
  %s5 = sld [smem:[#allocation0]]
  $region49: #{pam_module_forward.1} parent=0
    _
  %s7 = ssub.s32 1, %s5
  %s8 = scalar_select 0, %s7, %s5
  %9 = sst [smem:[#allocation2]] %s3
  loop: start=0, step=1, limit=4
  $region2: #{pam_module_forward.1} parent=0 // loop_pre_header
    _
  $region3: #{pam_module_forward.1} parent=0 // loop_header
    %s11 = sphi 0, %s15
    %p12 = scmp.ge.s32.totalorder %s11, 4
    %s21 = sphi 0, %s23
    %s24 = sphi 0, %s21
    %s25 = sphi 0, %s24
    %s41 = sphi 0, %s25
    %s45 = sphi 0, %s45
    %s47 = sphi 0, %s45
    %s48 = sphi 0, %s47
    %s62 = sphi 0, %s48
    %s66 = sphi 0, %s66
    %s68 = sphi 0, %s66
    %s69 = sphi 0, %s68
    %s83 = sphi 0, %s69
    %s87 = sphi 0, %s87
    %s89 = sphi 0, %s87
    %s90 = sphi 0, %s89
    %s104 = sphi 0, %s90
    %s110 = sphi 0, %s112
    %s113 = sphi 0, %s110
    %s114 = sphi 0, %s113
    %s130 = sphi 0, %s114
  $region4: #{pam_module_forward.1} parent=0 // loop_header_branch
    %14 = sbr.rel (%p12) target = $region8
  $region5: #{pam_module_forward.1} parent=0 // loop_body
    %s16 = ssub.s32 %s11, 1
    %s17 = ssub.s32 %s11, 2
    %s18 = sadd.s32 %s11, 1
    %s19 = ssub.s32 %s11, %s18
    %p20 = scmp.eq.s32.totalorder %s19, 0
    %s22 = sadd.s32 %s21, 1
    %s23 = scalar_select %p20, %s21, %s22
    %p26 = pneg %p20
    %p27 = scmp.eq.s32.totalorder %s11, 1
    %p28 = por %p26, %p27
    %p29 = scmp.ne.s32.totalorder %s21, %s24
    %p30 = scmp.eq.s32.totalorder %s11, 0
    %p31 = por %p29, %p30
    %p32 = scmp.ne.s32.totalorder %s21, %s24
    %p33 = scmp.eq.s32.totalorder %s16, 1
    %p34 = por %p32, %p33
    %p35 = scmp.ne.s32.totalorder %s24, %s25
    %p36 = scmp.eq.s32.totalorder %s16, 0
    %p37 = por %p35, %p36
    %p38 = scmp.ne.s32.totalorder %s24, %s25
    %p39 = scmp.eq.s32.totalorder %s17, 1
    %p40 = por %p38, %p39
    %p42 = scmp.ne.s32.totalorder %s25, %s41
    %p43 = scmp.eq.s32.totalorder %s17, 0
    %p44 = por %p42, %p43
    %s46 = sadd.s32 %s45, 1
    %p49 = scmp.eq.s32.totalorder %s11, 1
    %p50 = scmp.ne.s32.totalorder %s45, %s47
    %p51 = scmp.eq.s32.totalorder %s11, 0
    %p52 = por %p50, %p51
    %p53 = scmp.ne.s32.totalorder %s45, %s47
    %p54 = scmp.eq.s32.totalorder %s16, 1
    %p55 = por %p53, %p54
    %p56 = scmp.ne.s32.totalorder %s47, %s48
    %p57 = scmp.eq.s32.totalorder %s16, 0
    %p58 = por %p56, %p57
    %p59 = scmp.ne.s32.totalorder %s47, %s48
    %p60 = scmp.eq.s32.totalorder %s17, 1
    %p61 = por %p59, %p60
    %p63 = scmp.ne.s32.totalorder %s48, %s62
    %p64 = scmp.eq.s32.totalorder %s17, 0
    %p65 = por %p63, %p64
    %s67 = sadd.s32 %s66, 1
    %p70 = scmp.eq.s32.totalorder %s11, 1
    %p71 = scmp.ne.s32.totalorder %s66, %s68
    %p72 = scmp.eq.s32.totalorder %s11, 0
    %p73 = por %p71, %p72
    %p74 = scmp.ne.s32.totalorder %s66, %s68
    %p75 = scmp.eq.s32.totalorder %s16, 1
    %p76 = por %p74, %p75
    %p77 = scmp.ne.s32.totalorder %s68, %s69
    %p78 = scmp.eq.s32.totalorder %s16, 0
    %p79 = por %p77, %p78
    %p80 = scmp.ne.s32.totalorder %s68, %s69
    %p81 = scmp.eq.s32.totalorder %s17, 1
    %p82 = por %p80, %p81
    %p84 = scmp.ne.s32.totalorder %s69, %s83
    %p85 = scmp.eq.s32.totalorder %s17, 0
    %p86 = por %p84, %p85
    %s88 = sadd.s32 %s87, 1
    %p91 = scmp.eq.s32.totalorder %s11, 1
    %p92 = scmp.ne.s32.totalorder %s87, %s89
    %p93 = scmp.eq.s32.totalorder %s11, 0
    %p94 = por %p92, %p93
    %p95 = scmp.ne.s32.totalorder %s87, %s89
    %p96 = scmp.eq.s32.totalorder %s16, 1
    %p97 = por %p95, %p96
    %p98 = scmp.ne.s32.totalorder %s89, %s90
    %p99 = scmp.eq.s32.totalorder %s16, 0
    %p100 = por %p98, %p99
    %p101 = scmp.ne.s32.totalorder %s89, %s90
    %p102 = scmp.eq.s32.totalorder %s17, 1
    %p103 = por %p101, %p102
    %p105 = scmp.ne.s32.totalorder %s90, %s104
    %p106 = scmp.eq.s32.totalorder %s17, 0
    %p107 = por %p105, %p106
    %s108 = ssub.s32 %s11, %s18
    %p109 = scmp.eq.s32.totalorder %s108, 0
    %s111 = sadd.s32 %s110, 1
    %s112 = scalar_select %p109, %s110, %s111
    %p115 = pneg %p109
    %p116 = scmp.eq.s32.totalorder %s11, 1
    %p117 = por %p115, %p116
    %p118 = scmp.ne.s32.totalorder %s110, %s113
    %p119 = scmp.eq.s32.totalorder %s11, 0
    %p120 = por %p118, %p119
    %p121 = scmp.ne.s32.totalorder %s110, %s113
    %p122 = scmp.eq.s32.totalorder %s16, 1
    %p123 = por %p121, %p122
    %p124 = scmp.ne.s32.totalorder %s113, %s114
    %p125 = scmp.eq.s32.totalorder %s16, 0
    %p126 = por %p124, %p125
    %p127 = scmp.ne.s32.totalorder %s113, %s114
    %p128 = scmp.eq.s32.totalorder %s17, 1
    %p129 = por %p127, %p128
    %p131 = scmp.ne.s32.totalorder %s114, %s130
    %p132 = scmp.eq.s32.totalorder %s17, 0
    %p133 = por %p131, %p132
    %p134 = scmp.le.s32.totalorder 1, %s11
    %p135 = scmp.lt.s32.totalorder %s11, 3
    %p136 = pnand %p134, %p135
    %p137 = pneg %p136
    // Predicated region
    $region9: #{pam_module_forward.1} parent=5 // pred_check
      _
    $region10: #{pam_module_forward.1} parent=5 // pred_check_branch
      %139 = sbr.rel (%p136) target = $region12
    $region11: #{pam_module_forward.1} parent=5 // pred_region
      %s140 = ssub.s32 %s11, 1
      // Predicated region
      $region13: #{pam_module_forward.1} parent=11 // pred_check
        %p141 = pneg %p58
      $region14: #{pam_module_forward.1} parent=11 // pred_check_branch
        %143 = sbr.rel (%p141) target = $region16
      $region15: #{pam_module_forward.1} parent=11 // pred_region
        _
      $region16: #{pam_module_forward.1} parent=11 // pred_fallthru
        _
      // Predicated region
      $region17: #{pam_module_forward.1} parent=11 // pred_check
        %p144 = pneg %p79
      $region18: #{pam_module_forward.1} parent=11 // pred_check_branch
        %146 = sbr.rel (%p144) target = $region20
      $region19: #{pam_module_forward.1} parent=11 // pred_region
        _
      $region20: #{pam_module_forward.1} parent=11 // pred_fallthru
        _
      // Predicated region
      $region21: #{pam_module_forward.1} parent=11 // pred_check
        %p147 = pneg %p100
      $region22: #{pam_module_forward.1} parent=11 // pred_check_branch
        %149 = sbr.rel (%p147) target = $region24
      $region23: #{pam_module_forward.1} parent=11 // pred_region
        _
      $region24: #{pam_module_forward.1} parent=11 // pred_fallthru
        _
    $region12: #{pam_module_forward.1} parent=5 // pred_fallthru
      _
    %p150 = scmp.lt.s32.totalorder %s11, 2
    // Predicated region
    $region25: #{pam_module_forward.1} parent=5 // pred_check
      %p151 = pneg %p150
    $region26: #{pam_module_forward.1} parent=5 // pred_check_branch
      %153 = sbr.rel (%p151) target = $region28
    $region27: #{pam_module_forward.1} parent=5 // pred_region
      // Predicated region
      $region29: #{pam_module_forward.1} parent=27 // pred_check
        %p154 = pneg %p31
      $region30: #{pam_module_forward.1} parent=27 // pred_check_branch
        %156 = sbr.rel (%p154) target = $region32
      $region31: #{pam_module_forward.1} parent=27 // pred_region
        %p157 = scmp.lt.s32.totalorder %s11, 1
        %s158 = scalar_select %p157, %s11, 1
        %s159 = smul.addr %s158, 8
        %s160 = smul.addr %s159, 8
        %s161 = scalar_lea.vmem %s0, %s160
      $region32: #{pam_module_forward.1} parent=27 // pred_fallthru
        _
    $region28: #{pam_module_forward.1} parent=5 // pred_fallthru
      _
    %p162 = scmp.le.s32.totalorder 1, %s11
    %p163 = scmp.lt.s32.totalorder %s11, 3
    %p164 = pnand %p162, %p163
    %p165 = pneg %p164
    // Predicated region
    $region33: #{pam_module_forward.1} parent=5 // pred_check
      _
    $region34: #{pam_module_forward.1} parent=5 // pred_check_branch
      %167 = sbr.rel (%p164) target = $region36
    $region35: #{pam_module_forward.1} parent=5 // pred_region
      %s168 = ssub.s32 %s11, 1
      %p169 = scmp.lt.s32.totalorder %s16, 1
      %s170 = scalar_select %p169, %s16, 1
      %s171 = smul.addr %s170, 8
      %s172 = smul.addr %s171, 8
      %s173 = scalar_lea.vmem %s0, %s172
      %p174 = pneg %p37
      %p175 = pneg %p34
      %p176 = pneg %p58
      %p177 = pneg %p55
      %p178 = pneg %p79
      %p179 = pneg %p76
      %p180 = pneg %p100
      %p181 = pneg %p97
      %p182 = pneg %p126
      %p183 = pneg %p123
      %p184 = scmp.lt.s32.totalorder %s16, 1
      %s185 = scalar_select %p184, %s16, 1
      %s186 = smul.addr %s185, 8
      %s187 = smul.addr %s186, 8
      %s188 = scalar_lea.vmem %s4, %s187
      %p189 = scmp.lt.s32.totalorder %s16, 1
      %s190 = scalar_select %p189, %s16, 1
      %s191 = smul.addr %s190, 8
      %s192 = smul.addr %s191, 8
      %s193 = scalar_lea.vmem %s0, %s192
      %p194 = scmp.lt.s32.totalorder %s16, 1
      %s195 = scalar_select %p194, %s16, 1
      %s196 = smul.addr %s195, 8
      %s197 = smul.addr %s196, 8
      %s198 = scalar_lea.vmem %s4, %s197
      %v200 = vld [vmem:[%s193] sm:$0xff]
      %v201 = vld [vmem:[%s193 + $0x8] sm:$0xff]
      %v202 = vld [vmem:[%s193 + $0x10] sm:$0xff]
      %v203 = vld [vmem:[%s193 + $0x18] sm:$0xff]
      %v204 = vld [vmem:[%s193 + $0x20] sm:$0xff]
      %v205 = vld [vmem:[%s193 + $0x28] sm:$0xff]
      %v206 = vld [vmem:[%s193 + $0x30] sm:$0xff]
      %v207 = vld [vmem:[%s193 + $0x38] sm:$0xf]
      %v208 = vld [vmem:[%s1] sm:$0xf]
      %v209 = vld [vmem:[%s1 + $0x4] sm:$0xf]
      %v210 = vld [vmem:[%s1 + $0x8] sm:$0xf]
      %v211 = vld [vmem:[%s1 + $0xc] sm:$0xf]
      %v212 = vld [vmem:[%s1 + $0x10] sm:$0xf]
      %v213 = vld [vmem:[%s1 + $0x14] sm:$0xf]
      %v214 = vld [vmem:[%s1 + $0x18] sm:$0xf]
      %v215 = vld [vmem:[%s1 + $0x1c] sm:$0xf]
      %v216 = vld [vmem:[%s1 + $0x20] sm:$0xf]
      %v217 = vld [vmem:[%s1 + $0x24] sm:$0x3]
      %v218 = vpack.c.bf16 %v201, %v200
      %v219 = vpack.c.bf16 %v203, %v202
      %v220 = vpack.c.bf16 %v205, %v204
      %v221 = vpack.c.bf16 %v207, %v206
      %v222 = vld [vmem:[%s2] sm:$0xff]
      %v223 = vld [vmem:[%s2 + $0x8] sm:$0xff]
      %v224 = vld [vmem:[%s2 + $0x10] sm:$0xff]
      %v225 = vld [vmem:[%s2 + $0x18] sm:$0xff]
      %v226 = vld [vmem:[%s2 + $0x20] sm:$0xff]
      %v227 = vld [vmem:[%s2 + $0x28] sm:$0xff]
      %v228 = vld [vmem:[%s2 + $0x30] sm:$0xff]
      %v229 = vld [vmem:[%s2 + $0x38] sm:$0xff]
      %v230 = vld [vmem:[%s2 + $0x40] sm:$0xff]
      %v231 = vld [vmem:[%s2 + $0x48] sm:$0xf]
      %v242 = vunpack.c.l.b16 %v208
      %v243 = vunpack.c.l.b16 %v209
      %v244 = vunpack.c.l.b16 %v210
      %v245 = vunpack.c.l.b16 %v211
      %v246 = vunpack.c.l.b16 %v212
      %v247 = vunpack.c.l.b16 %v213
      %v248 = vunpack.c.l.b16 %v214
      %v249 = vunpack.c.l.b16 %v215
      %v250 = vunpack.c.l.b16 %v216
      %v251 = vunpack.c.l.b16 %v217
      %v252 = vpack.c.b16 %v243, %v242
      %v253 = vpack.c.b16 %v245, %v244
      %v254 = vpack.c.b16 %v247, %v246
      %v255 = vpack.c.b16 %v249, %v248
      %v256 = vpack.c.b16 %v251, %v250
      %vm257 = vcmask 490496
      %v259 = vsel %vm257, %v252, 0
      %v262 = vsel %vm257, %v253, 0
      %v265 = vsel %vm257, %v254, 0
      %v268 = vsel %vm257, %v255, 0
      %v271 = vsel %vm257, %v256, 0
      %vm273 = vcmask 1045504
      %v275 = vsel %vm273, %v221, 0
      %277 = vmatpush.bf16.msra.mxu0 0
      %278 = vmatpush.bf16.msra.mxu0 0
      %279 = vmatpush.bf16.msra.mxu0 0
      %280 = vmatpush.bf16.msra.mxu0 0
      %281 = vmatpush.bf16.msra.mxu0 %v275
      %282 = vmatpush.bf16.msra.mxu0 %v220
      %283 = vmatpush.bf16.msra.mxu0 %v219
      %284 = vmatpush.bf16.msra.mxu0 %v218
      %285 = vmatmul.bf16.gmra.mxu0 %v259
      %v286 = vpop.f32.mrf.mxu0
      %v287 = vadd.f32 %v222, %v286
      %v288 = vpop.f32.mrf.mxu0
      %v289 = vadd.f32 %v223, %v288
      %290 = vmatmul.bf16.gmra.mxu0 %v262
      %v291 = vpop.f32.mrf.mxu0
      %v292 = vadd.f32 %v224, %v291
      %v293 = vpop.f32.mrf.mxu0
      %v294 = vadd.f32 %v225, %v293
      %295 = vmatmul.bf16.gmra.mxu0 %v265
      %v296 = vpop.f32.mrf.mxu0
      %v297 = vadd.f32 %v226, %v296
      %v298 = vpop.f32.mrf.mxu0
      %v299 = vadd.f32 %v227, %v298
      %300 = vmatmul.bf16.gmra.mxu0 %v268
      %v301 = vpop.f32.mrf.mxu0
      %v302 = vadd.f32 %v228, %v301
      %v303 = vpop.f32.mrf.mxu0
      %v304 = vadd.f32 %v229, %v303
      %305 = vmatmul.bf16.gmra.mxu0 %v271
      %v306 = vpop.f32.mrf.mxu0
      %v307 = vadd.f32 %v230, %v306
      %v308 = vpop.f32.mrf.mxu0
      %v309 = vadd.f32 %v231, %v308
      %310 = vdwg.mxu0
      %v311 = vpack.c.bf16 %v287, %v287
      %v312 = vpack.c.bf16 %v289, %v289
      %v313 = vpack.c.bf16 %v294, %v292
      %v314 = vpack.c.bf16 %v299, %v297
      %v315 = vpack.c.bf16 %v304, %v302
      %v316 = vpack.c.bf16 %v309, %v307
      %317 = vxpose.xlu0.c.b16.start [1/8] %v312, 128
      %318 = vxpose.xlu0.c.b16.cont [2/8] 0, 128
      %319 = vxpose.xlu0.c.b16.cont [3/8] 0, 128
      %320 = vxpose.xlu0.c.b16.cont [4/8] 0, 128
      %321 = vxpose.xlu0.c.b16.cont [5/8] 0, 128
      %322 = vxpose.xlu0.c.b16.cont [6/8] 0, 128
      %323 = vxpose.xlu0.c.b16.cont [7/8] 0, 128
      %324 = vxpose.xlu0.c.b16.end [8/8] 0, 128
      %v325 = vpop.trf.xlu0
      %v326 = vpop.trf.xlu0
      %v327 = vpop.trf.xlu0
      %v328 = vpop.trf.xlu0
      %v329 = vpop.trf.xlu0
      %v330 = vpop.trf.xlu0
      %v331 = vpop.trf.xlu0
      %v332 = vpop.trf.xlu0
      %vm333 = vcmask 64512
      %v335 = vsel %vm333, %v325, 0
      %v338 = vsel %vm333, %v326, 0
      %v341 = vsel %vm333, %v327, 0
      %v344 = vsel %vm333, %v328, 0
      %vm346 = vcmask 1043456
      %v348 = vsel %vm346, %v311, 0
      %350 = vmatpush.bf16.msra.mxu0 0
      %351 = vmatpush.bf16.msra.mxu0 0
      %352 = vmatpush.bf16.msra.mxu0 0
      %353 = vmatpush.bf16.msra.mxu0 0
      %354 = vmatpush.bf16.msra.mxu0 0
      %355 = vmatpush.bf16.msra.mxu0 0
      %356 = vmatpush.bf16.msra.mxu0 0
      %357 = vmatpush.bf16.msra.mxu0 %v348
      %358 = vmatmul.bf16.gmra.mxu0 %v335
      %v359 = vpop.f32.mrf.mxu0
      %v360 = vadd.f32 0.0, %v359
      %v361 = vpop.f32.mrf.mxu0
      %v362 = vadd.f32 0.0, %v361
      %363 = vmatmul.bf16.gmra.mxu0 %v338
      %v364 = vpop.f32.mrf.mxu0
      %v365 = vadd.f32 0.0, %v364
      %v366 = vpop.f32.mrf.mxu0
      %v367 = vadd.f32 0.0, %v366
      %368 = vmatmul.bf16.gmra.mxu0 %v341
      %v369 = vpop.f32.mrf.mxu0
      %v370 = vadd.f32 0.0, %v369
      %v371 = vpop.f32.mrf.mxu0
      %v372 = vadd.f32 0.0, %v371
      %373 = vmatmul.bf16.gmra.mxu0 %v344
      %v374 = vpop.f32.mrf.mxu0
      %v375 = vadd.f32 0.0, %v374
      %v376 = vpop.f32.mrf.mxu0
      %377 = vdwg.mxu0
      %vm378 = vcmask 400384
      %v379 = vsel %vm378, %v360, -inf
      %v380 = vsel %vm378, %v362, -inf
      %v381 = vsel %vm378, %v365, -inf
      %v382 = vsel %vm378, %v367, -inf
      %v383 = vsel %vm378, %v370, -inf
      %v384 = vmax.f32 %v379, %v383
      %v385 = vsel %vm378, %v372, -inf
      %v386 = vmax.f32 %v380, %v385
      %vm387 = vcmask 393216
      %v388 = vsel %vm387, %v375, -inf
      %v389 = vmax.f32 %v381, %v388
      %v390 = vmax.f32 %v384, %v386
      %v391 = vmax.f32 %v389, %v382
      %v392 = vmax.f32 %v390, %v391
      %v393 = vrot.slane %v392, 4
      %v394 = vmax.f32 %v392, %v393
      %v395 = vrot.slane %v394, 2
      %v396 = vmax.f32 %v394, %v395
      %v397 = vrot.slane %v396, 1
      %v398 = vmax.f32 %v396, %v397
      %v399 = vsub.f32 %v360, %v398
      %v400 = vsub.f32 %v362, %v398
      %v401 = vsub.f32 %v365, %v398
      %v402 = vsub.f32 %v367, %v398
      %v403 = vsub.f32 %v370, %v398
      %v404 = vsub.f32 %v372, %v398
      %v405 = vsub.f32 %v375, %v398
      %v406 = vmul.f32 %v399, 1.442695
      %v407 = vpow.pop %v406
      %v408 = vmul.f32 %v400, 1.442695
      %v409 = vpow.pop %v408
      %v410 = vmul.f32 %v401, 1.442695
      %v411 = vpow.pop %v410
      %v412 = vmul.f32 %v402, 1.442695
      %v413 = vpow.pop %v412
      %v414 = vmul.f32 %v403, 1.442695
      %v415 = vpow.pop %v414
      %v416 = vmul.f32 %v404, 1.442695
      %v417 = vpow.pop %v416
      %v418 = vmul.f32 %v405, 1.442695
      %v419 = vpow.pop %v418
      %v420 = vsel %vm378, %v407, 0.0
      %v421 = vsel %vm378, %v409, 0.0
      %v422 = vadd.f32 %v420, %v421
      %v423 = vsel %vm378, %v411, 0.0
      %v424 = vadd.f32 %v422, %v423
      %v425 = vsel %vm378, %v413, 0.0
      %v426 = vadd.f32 %v424, %v425
      %v427 = vsel %vm378, %v415, 0.0
      %v428 = vadd.f32 %v426, %v427
      %v429 = vsel %vm378, %v417, 0.0
      %v430 = vadd.f32 %v428, %v429
      %v431 = vsel %vm387, %v419, 0.0
      %v432 = vadd.f32 %v430, %v431
      %v433 = vrot.slane %v432, 4
      %v434 = vadd.f32 %v432, %v433
      %v435 = vrot.slane %v434, 2
      %v436 = vadd.f32 %v434, %v435
      %v437 = vrot.slane %v436, 1
      %v438 = vadd.f32 %v436, %v437
      %v439 = vpack.c.bf16 %v409, %v407
      %v440 = vpack.c.bf16 %v413, %v411
      %v441 = vpack.c.bf16 %v417, %v415
      %v442 = vpack.c.bf16 %v419, %v419
      %v444 = vsel %vm378, %v313, 0
      %v447 = vsel %vm378, %v314, 0
      %v450 = vsel %vm378, %v315, 0
      %v453 = vsel %vm378, %v316, 0
      %vm455 = vcmask 1040384
      %v456 = vsel 0, 4294967295, 65535
      %v457 = vsel %vm455, %v456, 0
      %v459 = vand.u32 %v442, %v457
      %461 = vmatpush.bf16.msra.mxu0 0
      %462 = vmatpush.bf16.msra.mxu0 0
      %463 = vmatpush.bf16.msra.mxu0 0
      %464 = vmatpush.bf16.msra.mxu0 0
      %465 = vmatpush.bf16.msra.mxu0 %v459
      %466 = vmatpush.bf16.msra.mxu0 %v441
      %467 = vmatpush.bf16.msra.mxu0 %v440
      %468 = vmatpush.bf16.msra.mxu0 %v439
      %469 = vmatmul.bf16.gmra.mxu0 %v444
      %v470 = vpop.f32.mrf.mxu0
      %v471 = vadd.f32 0.0, %v470
      %v472 = vpop.f32.mrf.mxu0
      %v473 = vadd.f32 0.0, %v472
      %474 = vmatmul.bf16.gmra.mxu0 %v447
      %v475 = vpop.f32.mrf.mxu0
      %v476 = vadd.f32 0.0, %v475
      %v477 = vpop.f32.mrf.mxu0
      %v478 = vadd.f32 0.0, %v477
      %479 = vmatmul.bf16.gmra.mxu0 %v450
      %v480 = vpop.f32.mrf.mxu0
      %v481 = vadd.f32 0.0, %v480
      %v482 = vpop.f32.mrf.mxu0
      %v483 = vadd.f32 0.0, %v482
      %484 = vmatmul.bf16.gmra.mxu0 %v453
      %v485 = vpop.f32.mrf.mxu0
      %v486 = vadd.f32 0.0, %v485
      %v487 = vpop.f32.mrf.mxu0
      %v488 = vadd.f32 0.0, %v487
      %489 = vdwg.mxu0
      %v490 = vrcp.pop %v438
      %v491 = vmul.f32 %v471, %v490
      %v492 = vmul.f32 %v473, %v490
      %v493 = vmul.f32 %v476, %v490
      %v494 = vmul.f32 %v478, %v490
      %v495 = vmul.f32 %v481, %v490
      %v496 = vmul.f32 %v483, %v490
      %v497 = vmul.f32 %v486, %v490
      %v498 = vmul.f32 %v488, %v490
      %s499 = sld [smem:[#allocation2]]
      %v500 = vstv %s499
      %v501 = vmul.f32 %v500, %v491
      %v502 = vmul.f32 %v500, %v492
      %v503 = vmul.f32 %v500, %v493
      %v504 = vmul.f32 %v500, %v494
      %v505 = vmul.f32 %v500, %v495
      %v506 = vmul.f32 %v500, %v496
      %v507 = vmul.f32 %v500, %v497
      %v508 = vmul.f32 %v500, %v498
      %v509 = vadd.f32 %v501, %v200
      %v510 = vadd.f32 %v502, %v201
      %v511 = vadd.f32 %v503, %v202
      %v512 = vadd.f32 %v504, %v203
      %v513 = vadd.f32 %v505, %v204
      %v514 = vadd.f32 %v506, %v205
      %v515 = vadd.f32 %v507, %v206
      %v516 = vadd.f32 %v508, %v207
      %517 = vst.msk [vmem:[%s198] sm:$0xff] %vm378, %v509
      %518 = vst.msk [vmem:[%s198 + $0x8] sm:$0xff] %vm378, %v510
      %519 = vst.msk [vmem:[%s198 + $0x10] sm:$0xff] %vm378, %v511
      %520 = vst.msk [vmem:[%s198 + $0x18] sm:$0xff] %vm378, %v512
      %521 = vst.msk [vmem:[%s198 + $0x20] sm:$0xff] %vm378, %v513
      %522 = vst.msk [vmem:[%s198 + $0x28] sm:$0xff] %vm378, %v514
      %523 = vst.msk [vmem:[%s198 + $0x30] sm:$0xff] %vm378, %v515
      %vm524 = vcmask 396288
      %525 = vst.msk [vmem:[%s198 + $0x38] sm:$0xf] %vm524, %v516
      %p526 = scmp.lt.s32.totalorder %s16, 1
      %s527 = scalar_select %p526, %s16, 1
      %s528 = smul.addr %s527, 8
      %s529 = smul.addr %s528, 8
      %s530 = scalar_lea.vmem %s4, %s529
      // Predicated region
      $region37: #{pam_module_forward.1} parent=35 // pred_check
        %p531 = pneg %p123
      $region38: #{pam_module_forward.1} parent=35 // pred_check_branch
        %533 = sbr.rel (%p531) target = $region40
      $region39: #{pam_module_forward.1} parent=35 // pred_region
        _
      $region40: #{pam_module_forward.1} parent=35 // pred_fallthru
        _
    $region36: #{pam_module_forward.1} parent=5 // pred_fallthru
      _
    %p534 = scmp.le.s32.totalorder 2, %s11
    // Predicated region
    $region41: #{pam_module_forward.1} parent=5 // pred_check
      %p535 = pneg %p534
    $region42: #{pam_module_forward.1} parent=5 // pred_check_branch
      %537 = sbr.rel (%p535) target = $region44
    $region43: #{pam_module_forward.1} parent=5 // pred_region
      %s538 = ssub.s32 %s11, 2
      // Predicated region
      $region45: #{pam_module_forward.1} parent=43 // pred_check
        %p539 = pneg %p129
      $region46: #{pam_module_forward.1} parent=43 // pred_check_branch
        %541 = sbr.rel (%p539) target = $region48
      $region47: #{pam_module_forward.1} parent=43 // pred_region
        %p542 = scmp.lt.s32.totalorder %s17, 1
        %s543 = scalar_select %p542, %s17, 1
        %s544 = smul.addr %s543, 8
        %s545 = smul.addr %s544, 8
        %s546 = scalar_lea.vmem %s4, %s545
      $region48: #{pam_module_forward.1} parent=43 // pred_fallthru
        _
    $region44: #{pam_module_forward.1} parent=5 // pred_fallthru
      _
  $region6: #{pam_module_forward.1} parent=0 // loop_footer
    %s15 = sadd.s32 1, %s11
  $region7: #{pam_module_forward.1} parent=0 // loop_footer_branch
    %10 = sbr.rel target = $region3
  $region8: #{pam_module_forward.1} parent=0 // loop_exit
    _

</llo_original>
